<compile_context>
chip_gen: v5e
topology: v5e:2x2
jax: 0.10.0
libtpu: 0.0.40
codegen_flags: <defaults>
</compile_context>

<pallas_src>
import jax
import jax.numpy as jnp
from jax.experimental import pallas as pl
from jax.experimental.pallas import tpu as pltpu


def _seqnet_kernel(x_ref, w_ref, b_ref, o_ref):
    # x_ref: (Bt, L*Cin)   w_ref: (L*Cin, Nt)   b_ref: (1, Nt)   o_ref: (Bt, Nt)
    acc = jnp.dot(x_ref[...], w_ref[...], preferred_element_type=jnp.float32)
    o_ref[...] = (acc + b_ref[...].astype(jnp.float32)).astype(o_ref.dtype)


def seqnet_forward(x, conv_w, conv_b, *, block_b=256, block_n=512):
    """seqNet forward.

    x:      (B, seqL, inDims)   (or (B, inDims); unsqueezed like the module)
    conv_w: (outDims, inDims, w)   torch.nn.Conv1d weight layout
    conv_b: (outDims,)
    returns (B, outDims)
    """
    if x.ndim < 3:
        x = x[:, None, :]
    B, L, Cin = x.shape
    Cout, Cin_w, w = conv_w.shape
    assert Cin_w == Cin, "weight/input channel mismatch"
    l_out = L - w + 1
    assert l_out >= 1, "sequence shorter than conv kernel"

    # ---- Effective weight: conv + mean folded into one (L*Cin, Cout) matrix.
    # Veff[t*Cin + c, o] = (1/l_out) * sum_{k : 0 <= t-k <= l_out-1} W[o, c, k]
    t_idx = jnp.arange(L)[:, None]                    # (L, 1)
    k_idx = jnp.arange(w)[None, :]                    # (1, w)
    s_pos = t_idx - k_idx                             # conv output position
    valid = ((s_pos >= 0) & (s_pos <= l_out - 1)).astype(conv_w.dtype)  # (L, w)
    veff = jnp.einsum("tk,ock->tco", valid, conv_w,
                      precision=jax.lax.Precision.HIGHEST) * (1.0 / l_out)
    veff = veff.reshape(L * Cin, Cout)                # row index t*Cin + c
    b_row = conv_b.reshape(1, Cout)

    # ---- Flatten x to 2-D so the kernel block is one contiguous slab.
    K = L * Cin
    x2 = x.reshape(B, K)

    # ---- Batch tiling: large tiles, >= 2 parallel grid steps when possible.
    bt = min(block_b, B)
    if bt >= B and B >= 16:
        bt = max(8, (B // 2) // 8 * 8)                # 2 steps for v7x's 2 TCs
    grid_b = pl.cdiv(B, bt)
    b_pad = grid_b * bt
    if b_pad != B:                                    # ragged batch: zero-pad
        x2 = jnp.pad(x2, ((0, b_pad - B), (0, 0)))

    # ---- Optional Cout tiling (bounds the resident weight slab on v7x VMEM).
    if Cout > block_n and Cout % block_n == 0:
        tn = block_n
    else:
        tn = Cout
    grid_n = Cout // tn

    itemsize = jnp.dtype(x.dtype).itemsize
    cost = pl.CostEstimate(
        flops=2 * b_pad * K * Cout,
        transcendentals=0,
        bytes_accessed=(b_pad * K + K * Cout + Cout + b_pad * Cout) * itemsize,
    )

    out = pl.pallas_call(
        _seqnet_kernel,
        out_shape=jax.ShapeDtypeStruct((b_pad, Cout), x.dtype),
        grid_spec=pltpu.PrefetchScalarGridSpec(
            num_scalar_prefetch=0,
            grid=(grid_b, grid_n),
            in_specs=[
                pl.BlockSpec((bt, K), lambda b, n: (b, 0)),     # x block
                pl.BlockSpec((K, tn), lambda b, n: (0, n)),     # fused weight
                pl.BlockSpec((1, tn), lambda b, n: (0, n)),     # bias
            ],
            out_specs=pl.BlockSpec((bt, tn), lambda b, n: (b, n)),
        ),
        compiler_params=pltpu.CompilerParams(
            dimension_semantics=("parallel", "parallel")),
        cost_estimate=cost,
    )(x2, veff, b_row)

    return out[:B]


def _reference(x, conv_w, conv_b):
    """Pure-JAX reference of seqNet.forward (Conv1d + mean over time)."""
    if x.ndim < 3:
        x = x[:, None, :]
    B, L, Cin = x.shape
    Cout, _, w = conv_w.shape
    l_out = L - w + 1
    # im2col: cols[b, t, k, c] = x[b, t+k, c]
    cols = jnp.stack([x[:, k:k + l_out, :] for k in range(w)], axis=2)
    conv = jnp.einsum("blkc,ock->blo", cols, conv_w,
                      precision=jax.lax.Precision.HIGHEST) + conv_b
    return jnp.mean(conv, axis=1)                               # (B, Cout)


if __name__ == "__main__":
    # Small shapes consistent with the module: batch=16, seqL=10, inDims=32,
    # outDims=128, conv window w=5 (seqNet default).
    B, L, Cin, Cout, w = 16, 10, 32, 128, 5

    key = jax.random.PRNGKey(0)
    kx, kw, kb = jax.random.split(key, 3)

    x = jax.random.normal(kx, (B, L, Cin), dtype=jnp.float32)

    bound = 1.0 / (Cin * w) ** 0.5          # PyTorch Conv1d default init scale
    conv_w = jax.random.uniform(kw, (Cout, Cin, w), jnp.float32, -bound, bound)
    conv_b = jax.random.uniform(kb, (Cout,), jnp.float32, -bound, bound)

    out = seqnet_forward(x, conv_w, conv_b)
    out = jax.block_until_ready(out)

    ref = _reference(x, conv_w, conv_b)
    assert out.shape == (B, Cout)
    assert jnp.allclose(out, ref, atol=1e-3, rtol=1e-3), "mismatch vs reference"

    print("KERNEL_OK")
</pallas_src>

<mosaic_0001>
module attributes {stable_mosaic.version = 11 : i64} {
  func.func @_seqnet_kernel(%arg0: i32, %arg1: i32, %arg2: memref<8x320xf32, #tpu.memory_space<vmem>>, %arg3: memref<320x128xf32, #tpu.memory_space<vmem>>, %arg4: memref<1x128xf32, #tpu.memory_space<vmem>>, %arg5: memref<8x128xf32, #tpu.memory_space<vmem>>) attributes {dimension_semantics = [#tpu.dimension_semantics<parallel>, #tpu.dimension_semantics<parallel>], iteration_bounds = array<i64: 2, 1>, scalar_prefetch = 0 : i64, scratch_operands = 0 : i64, tpu.core_type = #tpu.core_type<tc>, window_params = [{transform_indices = @transform_0, window_bounds = array<i64: 8, 320>}, {transform_indices = @transform_1, window_bounds = array<i64: 320, 128>}, {transform_indices = @transform_2, window_bounds = array<i64: 1, 128>}, {transform_indices = @transform_3, window_bounds = array<i64: 8, 128>}]} {
    %c0 = arith.constant 0 : index
    %c0_0 = arith.constant 0 : index
    %0 = vector.load %arg2[%c0, %c0_0] : memref<8x320xf32, #tpu.memory_space<vmem>>, vector<8x320xf32>
    %c0_1 = arith.constant 0 : index
    %c0_2 = arith.constant 0 : index
    %1 = vector.load %arg3[%c0_1, %c0_2] : memref<320x128xf32, #tpu.memory_space<vmem>>, vector<320x128xf32>
    %cst = arith.constant dense<0.000000e+00> : vector<8x128xf32>
    %2 = tpu.matmul %0, %1, %cst {dimension_numbers = #tpu.dot_dimension_numbers<[1], [0], [0], [1], [0, 0, 1, 1], [], []>} : vector<8x320xf32>, vector<320x128xf32>, vector<8x128xf32> -> vector<8x128xf32>
    %c0_3 = arith.constant 0 : index
    %c0_4 = arith.constant 0 : index
    %3 = vector.load %arg4[%c0_3, %c0_4] : memref<1x128xf32, #tpu.memory_space<vmem>>, vector<1x128xf32>
    %4 = vector.broadcast %3 : vector<1x128xf32> to vector<8x128xf32>
    %5 = arith.addf %2, %4 : vector<8x128xf32>
    %c0_5 = arith.constant 0 : index
    %c0_6 = arith.constant 0 : index
    %6 = vector.load %arg5[%c0_5, %c0_6] : memref<8x128xf32, #tpu.memory_space<vmem>>, vector<8x128xf32>
    tpu.vector_store %arg5[%c0_5, %c0_6], %5 {strides = array<i32>} : memref<8x128xf32, #tpu.memory_space<vmem>>, vector<8x128xf32>,
    return
  }
  func.func @transform_0(%arg0: i32, %arg1: i32) -> (i32, i32) {
    %c0_i32 = arith.constant 0 : i32
    %c0_i32_0 = arith.constant 0 : i32
    return %arg0, %c0_i32 : i32, i32
  }
  func.func @transform_1(%arg0: i32, %arg1: i32) -> (i32, i32) {
    %c0_i32 = arith.constant 0 : i32
    %c0_i32_0 = arith.constant 0 : i32
    return %c0_i32, %arg1 : i32, i32
  }
  func.func @transform_2(%arg0: i32, %arg1: i32) -> (i32, i32) {
    %c0_i32 = arith.constant 0 : i32
    %c0_i32_0 = arith.constant 0 : i32
    return %c0_i32, %arg1 : i32, i32
  }
  func.func @transform_3(%arg0: i32, %arg1: i32) -> (i32, i32) {
    %c0_i32 = arith.constant 0 : i32
    return %arg0, %arg1 : i32, i32
  }
}

</mosaic_0001>

<llo_original>
// kernel: tpu_custom_call.1
$region0: #{tpu_custom_call.1}
  #allocation0 [shape = 'u32[]', space=smem, size = 0x4, offset = 0x4, fixed_abs, tag = 'smem constant byte address 0x4 - core index']
  #allocation1 [shape = 'u32[72,128]{1,0:T(1,128)}', space=vmem, size = 0x9000, scoped, tag = 'internal scratch']
  %s0 = inlined_call_operand.hbm [shape: f32[16,320], index: 0, kind: input, shape index: {}]
  %s1 = inlined_call_operand.hbm [shape: f32[320,128], index: 1, kind: input, shape index: {}]
  %s2 = inlined_call_operand.vmem [shape: f32[1,128], index: 2, kind: input, shape index: {}]
  %s3 = inlined_call_operand.hbm [shape: f32[16,128], index: 3, kind: output, shape index: {}]
  %s4 = sld [smem:[#allocation0]]
  $region53: #{tpu_custom_call.1} parent=0
    _
  %s6 = ssub.s32 1, %s4
  %s7 = scalar_select 0, %s6, %s4
  $region1: #{tpu_custom_call.1} parent=0
    #allocation2 [shape = 'u8[24576]{0}', space=vmem, size = 0x6000, scoped, tag = 'input window, operand 0']
    #allocation3 [shape = 's32[2]{0}', space=sflag, size = 0x8, scoped, tag = 'scoped memory for tpu_custom_call.1']
    #allocation4 [shape = 's32[2]{0}', space=sflag, size = 0x8, scoped, tag = 'scoped memory for tpu_custom_call.1']
    #allocation5 [shape = 'u8[163840]{0}', space=vmem, size = 0x28000, scoped, tag = 'input window, operand 1, single buffered']
    #allocation6 [shape = 's32[1]{0}', space=sflag, size = 0x4, scoped, tag = 'scoped memory for tpu_custom_call.1']
    #allocation7 [shape = 'u8[8192]{0}', space=vmem, size = 0x2000, scoped, tag = 'output window, operand 0']
    %8 = vsyncpa [#allocation3], 0
    %s9 = scalar_lea.sflag [#allocation3], 1
    %10 = vsyncpa %s9, 0
    %11 = vsyncpa [#allocation6], 0
    %12 = vsyncpa [#allocation4], 0
    %s13 = scalar_lea.sflag [#allocation4], 1
    %14 = vsyncpa %s13, 0
    loop: start=0, step=1, limit=4
    $region2: #{tpu_custom_call.1} parent=1 // loop_pre_header
      _
    $region3: #{tpu_custom_call.1} parent=1 // loop_header
      %s16 = sphi 0, %s20
      %p17 = scmp.ge.s32.totalorder %s16, 4
      %s23 = sphi 0, %s35
      %s24 = sphi 0, %s31
      %s25 = sphi 0, %s23
      %s26 = sphi 0, %s24
      %s27 = sphi 0, %s25
      %s28 = sphi 0, %s26
      %s38 = sphi 0, %s40
      %s41 = sphi 0, %s38
      %s42 = sphi 0, %s41
      %s58 = sphi 0, %s42
      %s64 = sphi 0, %s66
      %s67 = sphi 0, %s64
      %s68 = sphi 0, %s67
      %s84 = sphi 0, %s68
      %s90 = sphi 0, %s92
      %s93 = sphi 0, %s90
      %s94 = sphi 0, %s93
      %s110 = sphi 0, %s94
      %s118 = sphi 0, %s120
      %s121 = sphi 0, %s118
      %s122 = sphi 0, %s121
      %s138 = sphi 0, %s122
    $region4: #{tpu_custom_call.1} parent=1 // loop_header_branch
      %19 = sbr.rel (%p17) target = $region8
    $region5: #{tpu_custom_call.1} parent=1 // loop_body
      %s21 = ssub.s32 %s16, 1
      %s22 = ssub.s32 %s16, 2
      %s29 = sadd.s32 1, %s24
      %p30 = scmp.ge.s32.totalorder %s29, 1
      %s31 = scalar_select %p30, 0, %s29
      %s32 = sadd.s32 1, %s23
      %s33 = scalar_select %p30, %s32, %s23
      %p34 = scmp.ge.s32.totalorder %s33, 2
      %s35 = scalar_select %p34, 0, %s33
      %s36 = ssub.s32 %s23, %s35
      %p37 = scmp.eq.s32.totalorder %s36, 0
      %s39 = sadd.s32 %s38, 1
      %s40 = scalar_select %p37, %s38, %s39
      %p43 = pneg %p37
      %p44 = scmp.eq.s32.totalorder %s16, 1
      %p45 = por %p43, %p44
      %p46 = scmp.ne.s32.totalorder %s38, %s41
      %p47 = scmp.eq.s32.totalorder %s16, 0
      %p48 = por %p46, %p47
      %p49 = scmp.ne.s32.totalorder %s38, %s41
      %p50 = scmp.eq.s32.totalorder %s21, 1
      %p51 = por %p49, %p50
      %p52 = scmp.ne.s32.totalorder %s41, %s42
      %p53 = scmp.eq.s32.totalorder %s21, 0
      %p54 = por %p52, %p53
      %p55 = scmp.ne.s32.totalorder %s41, %s42
      %p56 = scmp.eq.s32.totalorder %s22, 1
      %p57 = por %p55, %p56
      %p59 = scmp.ne.s32.totalorder %s42, %s58
      %p60 = scmp.eq.s32.totalorder %s22, 0
      %p61 = por %p59, %p60
      %s62 = ssub.s32 %s24, %s31
      %p63 = scmp.eq.s32.totalorder %s62, 0
      %s65 = sadd.s32 %s64, 1
      %s66 = scalar_select %p63, %s64, %s65
      %p69 = pneg %p63
      %p70 = scmp.eq.s32.totalorder %s16, 1
      %p71 = por %p69, %p70
      %p72 = scmp.ne.s32.totalorder %s64, %s67
      %p73 = scmp.eq.s32.totalorder %s16, 0
      %p74 = por %p72, %p73
      %p75 = scmp.ne.s32.totalorder %s64, %s67
      %p76 = scmp.eq.s32.totalorder %s21, 1
      %p77 = por %p75, %p76
      %p78 = scmp.ne.s32.totalorder %s67, %s68
      %p79 = scmp.eq.s32.totalorder %s21, 0
      %p80 = por %p78, %p79
      %p81 = scmp.ne.s32.totalorder %s67, %s68
      %p82 = scmp.eq.s32.totalorder %s22, 1
      %p83 = por %p81, %p82
      %p85 = scmp.ne.s32.totalorder %s68, %s84
      %p86 = scmp.eq.s32.totalorder %s22, 0
      %p87 = por %p85, %p86
      %s88 = ssub.s32 %s24, %s31
      %p89 = scmp.eq.s32.totalorder %s88, 0
      %s91 = sadd.s32 %s90, 1
      %s92 = scalar_select %p89, %s90, %s91
      %p95 = pneg %p89
      %p96 = scmp.eq.s32.totalorder %s16, 1
      %p97 = por %p95, %p96
      %p98 = scmp.ne.s32.totalorder %s90, %s93
      %p99 = scmp.eq.s32.totalorder %s16, 0
      %p100 = por %p98, %p99
      %p101 = scmp.ne.s32.totalorder %s90, %s93
      %p102 = scmp.eq.s32.totalorder %s21, 1
      %p103 = por %p101, %p102
      %p104 = scmp.ne.s32.totalorder %s93, %s94
      %p105 = scmp.eq.s32.totalorder %s21, 0
      %p106 = por %p104, %p105
      %p107 = scmp.ne.s32.totalorder %s93, %s94
      %p108 = scmp.eq.s32.totalorder %s22, 1
      %p109 = por %p107, %p108
      %p111 = scmp.ne.s32.totalorder %s94, %s110
      %p112 = scmp.eq.s32.totalorder %s22, 0
      %p113 = por %p111, %p112
      %s114 = ssub.s32 %s23, %s35
      %s115 = ssub.s32 %s24, %s31
      %s116 = sor.u32 %s114, %s115
      %p117 = scmp.eq.s32.totalorder %s116, 0
      %s119 = sadd.s32 %s118, 1
      %s120 = scalar_select %p117, %s118, %s119
      %p123 = pneg %p117
      %p124 = scmp.eq.s32.totalorder %s16, 1
      %p125 = por %p123, %p124
      %p126 = scmp.ne.s32.totalorder %s118, %s121
      %p127 = scmp.eq.s32.totalorder %s16, 0
      %p128 = por %p126, %p127
      %p129 = scmp.ne.s32.totalorder %s118, %s121
      %p130 = scmp.eq.s32.totalorder %s21, 1
      %p131 = por %p129, %p130
      %p132 = scmp.ne.s32.totalorder %s121, %s122
      %p133 = scmp.eq.s32.totalorder %s21, 0
      %p134 = por %p132, %p133
      %p135 = scmp.ne.s32.totalorder %s121, %s122
      %p136 = scmp.eq.s32.totalorder %s22, 1
      %p137 = por %p135, %p136
      %p139 = scmp.ne.s32.totalorder %s122, %s138
      %p140 = scmp.eq.s32.totalorder %s22, 0
      %p141 = por %p139, %p140
      %p142 = scmp.le.s32.totalorder 1, %s16
      %p143 = scmp.lt.s32.totalorder %s16, 3
      %p144 = pnand %p142, %p143
      %p145 = pneg %p144
      // Predicated region
      $region9: #{tpu_custom_call.1} parent=5 // pred_check
        _
      $region10: #{tpu_custom_call.1} parent=5 // pred_check_branch
        %147 = sbr.rel (%p144) target = $region12
      $region11: #{tpu_custom_call.1} parent=5 // pred_region
        %s148 = ssub.s32 %s16, 1
        // Predicated region
        $region13: #{tpu_custom_call.1} parent=11 // pred_check
          %p149 = pneg %p80
        $region14: #{tpu_custom_call.1} parent=11 // pred_check_branch
          %151 = sbr.rel (%p149) target = $region16
        $region15: #{tpu_custom_call.1} parent=11 // pred_region
          %153 = vsyncadd [#allocation6], 0
          %s154 = smul.addr %s26, 8
          %s155 = scalar_lea.hbm %s1, %s154
          %s156 = sshll.u32 %s155, 4
          %s157 = int_to_ptr.hbm [resolvable:$true] %s156
          %s158 = sshll.u32 [#allocation5], 4
          %s159 = int_to_ptr.vmem [resolvable:$true] %s158
          %164 = dma.hbm_to_vmem [thread:$0]  %s157, 5120, %s159, [#allocation6], 128, 128, 8
        $region16: #{tpu_custom_call.1} parent=11 // pred_fallthru
          _
        // Predicated region
        $region17: #{tpu_custom_call.1} parent=11 // pred_check
          %p165 = pneg %p106
        $region18: #{tpu_custom_call.1} parent=11 // pred_check_branch
          %167 = sbr.rel (%p165) target = $region20
        $region19: #{tpu_custom_call.1} parent=11 // pred_region
          %p168 = scmp.lt.s32.totalorder %s26, 0
          %s169 = scalar_select %p168, %s26, 0
          %s170 = scalar_lea.vmem %s2, %s169
        $region20: #{tpu_custom_call.1} parent=11 // pred_fallthru
          _
      $region12: #{tpu_custom_call.1} parent=5 // pred_fallthru
        _
      %p171 = scmp.lt.s32.totalorder %s16, 2
      // Predicated region
      $region21: #{tpu_custom_call.1} parent=5 // pred_check
        %p172 = pneg %p171
      $region22: #{tpu_custom_call.1} parent=5 // pred_check_branch
        %174 = sbr.rel (%p172) target = $region24
      $region23: #{tpu_custom_call.1} parent=5 // pred_region
        // Predicated region
        $region25: #{tpu_custom_call.1} parent=23 // pred_check
          %p175 = pneg %p48
        $region26: #{tpu_custom_call.1} parent=23 // pred_check_branch
          %177 = sbr.rel (%p175) target = $region28
        $region27: #{tpu_custom_call.1} parent=23 // pred_region
          %s178 = sand.u32 %s38, 1
          %s179 = scalar_lea.sflag [#allocation3], %s178
          %s180 = sand.u32 %s38, 1
          %s181 = smul.addr %s180, 24
          %s182 = scalar_lea.vmem [#allocation2], %s181
          %184 = vsyncadd %s179, 0
          %s185 = smul.addr %s23, 3
          %s186 = smul.addr %s185, 8
          %s187 = scalar_lea.hbm %s0, %s186
          %s189 = sshll.u32 %s187, 4
          %s190 = int_to_ptr.hbm [resolvable:$true] %s189
          %s191 = sshll.u32 %s182, 4
          %s192 = int_to_ptr.vmem [resolvable:$true] %s191
          %194 = dma.hbm_to_vmem [thread:$0]  %s190, 384, %s192, %s179
        $region28: #{tpu_custom_call.1} parent=23 // pred_fallthru
          _
      $region24: #{tpu_custom_call.1} parent=5 // pred_fallthru
        _
      %p195 = scmp.le.s32.totalorder 1, %s16
      %p196 = scmp.lt.s32.totalorder %s16, 3
      %p197 = pnand %p195, %p196
      %p198 = pneg %p197
      // Predicated region
      $region29: #{tpu_custom_call.1} parent=5 // pred_check
        _
      $region30: #{tpu_custom_call.1} parent=5 // pred_check_branch
        %200 = sbr.rel (%p197) target = $region32
      $region31: #{tpu_custom_call.1} parent=5 // pred_region
        %s201 = ssub.s32 %s16, 1
        %s202 = sand.u32 %s41, 1
        %s203 = scalar_lea.sflag [#allocation3], %s202
        %s204 = sand.u32 %s41, 1
        %s205 = smul.addr %s204, 24
        %s206 = scalar_lea.vmem [#allocation2], %s205
        // Predicated region
        $region33: #{tpu_custom_call.1} parent=31 // pred_check
          %p207 = pneg %p54
        $region34: #{tpu_custom_call.1} parent=31 // pred_check_branch
          %209 = sbr.rel (%p207) target = $region36
        $region35: #{tpu_custom_call.1} parent=31 // pred_region
          %211 = dma.done %s203, 384
        $region36: #{tpu_custom_call.1} parent=31 // pred_fallthru
          _
        // Predicated region
        $region37: #{tpu_custom_call.1} parent=31 // pred_check
          %p212 = pneg %p80
        $region38: #{tpu_custom_call.1} parent=31 // pred_check_branch
          %214 = sbr.rel (%p212) target = $region40
        $region39: #{tpu_custom_call.1} parent=31 // pred_region
          %216 = dma.done [#allocation6], 5120
        $region40: #{tpu_custom_call.1} parent=31 // pred_fallthru
          _
        %s217 = sand.u32 %s41, 1
        %s218 = scalar_lea.sflag [#allocation3], %s217
        %s219 = sand.u32 %s41, 1
        %s220 = smul.addr %s219, 24
        %s221 = scalar_lea.vmem [#allocation2], %s220
        %p222 = pneg %p54
        %p223 = pneg %p51
        %p224 = pneg %p80
        %p225 = pneg %p77
        %p226 = scmp.lt.s32.totalorder %s26, 0
        %s227 = scalar_select %p226, %s26, 0
        %s228 = scalar_lea.vmem %s2, %s227
        %p229 = pneg %p106
        %p230 = pneg %p103
        %p231 = pneg %p134
        %p232 = pneg %p131
        %s233 = sand.u32 %s121, 1
        %s234 = scalar_lea.sflag [#allocation4], %s233
        %s235 = sand.u32 %s121, 1
        %s236 = smul.addr %s235, 8
        %s237 = scalar_lea.vmem [#allocation7], %s236
        %p238 = scmp.lt.s32.totalorder %s26, 0
        %s239 = scalar_select %p238, %s26, 0
        %s240 = scalar_lea.vmem %s2, %s239
        %v241 = vld [vmem:[%s206] sm:$0xff]
        %v242 = vld [vmem:[%s206 + $0x8] sm:$0xff]
        %v243 = vld [vmem:[%s206 + $0x10] sm:$0xff]
        %v244 = vld [vmem:[#allocation5] sm:$0xff]
        %v245 = vld [vmem:[#allocation5 + $0x8] sm:$0xff]
        %v246 = vld [vmem:[#allocation5 + $0x10] sm:$0xff]
        %v247 = vld [vmem:[#allocation5 + $0x18] sm:$0xff]
        %v248 = vld [vmem:[#allocation5 + $0x20] sm:$0xff]
        %v249 = vld [vmem:[#allocation5 + $0x28] sm:$0xff]
        %v250 = vld [vmem:[#allocation5 + $0x30] sm:$0xff]
        %v251 = vld [vmem:[#allocation5 + $0x38] sm:$0xff]
        %v252 = vld [vmem:[#allocation5 + $0x40] sm:$0xff]
        %v253 = vld [vmem:[#allocation5 + $0x48] sm:$0xff]
        %v254 = vld [vmem:[#allocation5 + $0x50] sm:$0xff]
        %v255 = vld [vmem:[#allocation5 + $0x58] sm:$0xff]
        %v256 = vld [vmem:[#allocation5 + $0x60] sm:$0xff]
        %v257 = vld [vmem:[#allocation5 + $0x68] sm:$0xff]
        %v258 = vld [vmem:[#allocation5 + $0x70] sm:$0xff]
        %v259 = vld [vmem:[#allocation5 + $0x78] sm:$0xff]
        %v260 = vld [vmem:[#allocation5 + $0x80] sm:$0xff]
        %v261 = vld [vmem:[#allocation5 + $0x88] sm:$0xff]
        %v262 = vld [vmem:[#allocation5 + $0x90] sm:$0xff]
        %v263 = vld [vmem:[#allocation5 + $0x98] sm:$0xff]
        %v264 = vld [vmem:[#allocation5 + $0xa0] sm:$0xff]
        %v265 = vld [vmem:[#allocation5 + $0xa8] sm:$0xff]
        %v266 = vld [vmem:[#allocation5 + $0xb0] sm:$0xff]
        %v267 = vld [vmem:[#allocation5 + $0xb8] sm:$0xff]
        %v268 = vld [vmem:[#allocation5 + $0xc0] sm:$0xff]
        %v269 = vld [vmem:[#allocation5 + $0xc8] sm:$0xff]
        %v270 = vld [vmem:[#allocation5 + $0xd0] sm:$0xff]
        %v271 = vld [vmem:[#allocation5 + $0xd8] sm:$0xff]
        %v272 = vld [vmem:[#allocation5 + $0xe0] sm:$0xff]
        %v273 = vld [vmem:[#allocation5 + $0xe8] sm:$0xff]
        %v274 = vld [vmem:[#allocation5 + $0xf0] sm:$0xff]
        %v275 = vld [vmem:[#allocation5 + $0xf8] sm:$0xff]
        %v276 = vld [vmem:[#allocation5 + $0x100] sm:$0xff]
        %v277 = vld [vmem:[#allocation5 + $0x108] sm:$0xff]
        %v278 = vld [vmem:[#allocation5 + $0x110] sm:$0xff]
        %v279 = vld [vmem:[#allocation5 + $0x118] sm:$0xff]
        %v280 = vld [vmem:[#allocation5 + $0x120] sm:$0xff]
        %v281 = vld [vmem:[#allocation5 + $0x128] sm:$0xff]
        %v282 = vld [vmem:[#allocation5 + $0x130] sm:$0xff]
        %v283 = vld [vmem:[#allocation5 + $0x138] sm:$0xff]
        %v284 = vld [vmem:[%s240] sm:$0x1]
        %v286 = vperm.slane %v284, 0
        %vm288 = vcmask 523264
        %v290 = vsel %vm288, %v243, 0
        %292 = vmatpush.msra.mxu0 %v259
        %293 = vmatpush.msra.mxu0 %v258
        %294 = vmatpush.msra.mxu0 %v257
        %295 = vmatpush.msra.mxu0 %v256
        %296 = vmatpush.msra.mxu0 %v255
        %297 = vmatpush.msra.mxu0 %v254
        %298 = vmatpush.msra.mxu0 %v253
        %299 = vmatpush.msra.mxu0 %v252
        %300 = vmatpush.msra.mxu0 %v251
        %301 = vmatpush.msra.mxu0 %v250
        %302 = vmatpush.msra.mxu0 %v249
        %303 = vmatpush.msra.mxu0 %v248
        %304 = vmatpush.msra.mxu0 %v247
        %305 = vmatpush.msra.mxu0 %v246
        %306 = vmatpush.msra.mxu0 %v245
        %307 = vmatpush.msra.mxu0 %v244
        %308 = vmatmul.f32.gmra.mxu0 %v241
        %v309 = vpop.f32.mrf.mxu0
        %v310 = vadd.f32 %v286, %v309
        %311 = vdwg.mxu0
        %312 = vmatpush.msra.mxu0 %v275
        %313 = vmatpush.msra.mxu0 %v274
        %314 = vmatpush.msra.mxu0 %v273
        %315 = vmatpush.msra.mxu0 %v272
        %316 = vmatpush.msra.mxu0 %v271
        %317 = vmatpush.msra.mxu0 %v270
        %318 = vmatpush.msra.mxu0 %v269
        %319 = vmatpush.msra.mxu0 %v268
        %320 = vmatpush.msra.mxu0 %v267
        %321 = vmatpush.msra.mxu0 %v266
        %322 = vmatpush.msra.mxu0 %v265
        %323 = vmatpush.msra.mxu0 %v264
        %324 = vmatpush.msra.mxu0 %v263
        %325 = vmatpush.msra.mxu0 %v262
        %326 = vmatpush.msra.mxu0 %v261
        %327 = vmatpush.msra.mxu0 %v260
        %328 = vmatmul.f32.gmra.mxu0 %v242
        %v329 = vpop.f32.mrf.mxu0
        %v330 = vadd.f32 %v310, %v329
        %331 = vdwg.mxu0
        %332 = vmatpush.msra.mxu0 0.0
        %333 = vmatpush.msra.mxu0 0.0
        %334 = vmatpush.msra.mxu0 0.0
        %335 = vmatpush.msra.mxu0 0.0
        %336 = vmatpush.msra.mxu0 0.0
        %337 = vmatpush.msra.mxu0 0.0
        %338 = vmatpush.msra.mxu0 0.0
        %339 = vmatpush.msra.mxu0 0.0
        %340 = vmatpush.msra.mxu0 %v283
        %341 = vmatpush.msra.mxu0 %v282
        %342 = vmatpush.msra.mxu0 %v281
        %343 = vmatpush.msra.mxu0 %v280
        %344 = vmatpush.msra.mxu0 %v279
        %345 = vmatpush.msra.mxu0 %v278
        %346 = vmatpush.msra.mxu0 %v277
        %347 = vmatpush.msra.mxu0 %v276
        %348 = vmatmul.f32.gmra.mxu0 %v290
        %v349 = vpop.f32.mrf.mxu0
        %v350 = vadd.f32 %v330, %v349
        %351 = vdwg.mxu0
        %352 = vst [vmem:[%s237] sm:$0xff] %v350
        %s353 = sand.u32 %s121, 1
        %s354 = scalar_lea.sflag [#allocation4], %s353
        %s355 = sand.u32 %s121, 1
        %s356 = smul.addr %s355, 8
        %s357 = scalar_lea.vmem [#allocation7], %s356
        // Predicated region
        $region41: #{tpu_custom_call.1} parent=31 // pred_check
          %p358 = pneg %p131
        $region42: #{tpu_custom_call.1} parent=31 // pred_check_branch
          %360 = sbr.rel (%p358) target = $region44
        $region43: #{tpu_custom_call.1} parent=31 // pred_region
          %362 = vsyncadd %s354, 0
          %s363 = sadd.s32 %s26, %s25
          %s364 = smul.addr %s363, 8
          %s365 = scalar_lea.hbm %s3, %s364
          %s367 = sshll.u32 %s357, 4
          %s368 = int_to_ptr.vmem [resolvable:$true] %s367
          %s369 = sshll.u32 %s365, 4
          %s370 = int_to_ptr.hbm [resolvable:$true] %s369
          %372 = dma.vmem_to_hbm [thread:$0]  %s368, 128, %s370, %s354
        $region44: #{tpu_custom_call.1} parent=31 // pred_fallthru
          _
      $region32: #{tpu_custom_call.1} parent=5 // pred_fallthru
        _
      %p373 = scmp.le.s32.totalorder 2, %s16
      // Predicated region
      $region45: #{tpu_custom_call.1} parent=5 // pred_check
        %p374 = pneg %p373
      $region46: #{tpu_custom_call.1} parent=5 // pred_check_branch
        %376 = sbr.rel (%p374) target = $region48
      $region47: #{tpu_custom_call.1} parent=5 // pred_region
        %s377 = ssub.s32 %s16, 2
        // Predicated region
        $region49: #{tpu_custom_call.1} parent=47 // pred_check
          %p378 = pneg %p137
        $region50: #{tpu_custom_call.1} parent=47 // pred_check_branch
          %380 = sbr.rel (%p378) target = $region52
        $region51: #{tpu_custom_call.1} parent=47 // pred_region
          %s381 = sand.u32 %s122, 1
          %s382 = scalar_lea.sflag [#allocation4], %s381
          %s383 = sand.u32 %s122, 1
          %s384 = smul.addr %s383, 8
          %s385 = scalar_lea.vmem [#allocation7], %s384
          %387 = dma.done %s382, 128
        $region52: #{tpu_custom_call.1} parent=47 // pred_fallthru
          _
      $region48: #{tpu_custom_call.1} parent=5 // pred_fallthru
        _
    $region6: #{tpu_custom_call.1} parent=1 // loop_footer
      %s20 = sadd.s32 1, %s16
    $region7: #{tpu_custom_call.1} parent=1 // loop_footer_branch
      %15 = sbr.rel target = $region3
    $region8: #{tpu_custom_call.1} parent=1 // loop_exit
      _
    %388 = vsyncpa [#allocation3], 1
    %s389 = scalar_lea.sflag [#allocation3], 1
    %390 = vsyncpa %s389, 1
    %391 = vsyncpa [#allocation6], 1
    %392 = vsyncpa [#allocation4], 1
    %s393 = scalar_lea.sflag [#allocation4], 1
    %394 = vsyncpa %s393, 1

</llo_original>
